<compile_context>
chip_gen: v7x
topology: tpu7x:2x2x1
jax: 0.10.0
libtpu: 0.0.40
codegen_flags: <defaults>
</compile_context>

<pallas_src>
import math
import functools

import jax
import jax.numpy as jnp
from jax import lax
from jax.experimental import pallas as pl
from jax.experimental.pallas import tpu as pltpu


_LANE = 128
_MIN_STEP_BYTES = 2 << 20          # only prefer "many grid steps" when each step carries >=2 MiB


# ---------------------------------------------------------------------------
# hardware-aware sizing helpers
# ---------------------------------------------------------------------------

def _vmem_capacity_bytes():
    try:
        info = pltpu.get_tpu_info()
        cap = int(getattr(info, "vmem_capacity_bytes", 0))
        if cap > 0:
            return cap
    except Exception:
        pass
    return 64 << 20                # conservative default (v7x per-TC VMEM)


def _hw_params():
    """(tile_budget_bytes, vmem_limit_cap_bytes, n_tensorcores)."""
    cap = _vmem_capacity_bytes()
    v7x_like = cap <= (64 << 20)   # v7x: 64 MiB/TC, 2 TCs; v5e/v6e: 128 MiB, 1 TC
    if v7x_like:
        return 24 << 20, 40 << 20, 2
    return 80 << 20, 100 << 20, 1


def _divisors(n):
    ds = set()
    i = 1
    while i * i <= n:
        if n % i == 0:
            ds.add(i)
            ds.add(n // i)
        i += 1
    return sorted(ds, reverse=True)


def _pick_block_b(B, N, D, itemsize, tile_budget, n_tc):
    """Largest batch tile (a divisor of B, lane-dense when possible) whose
    double-buffered q/k/out tiles fit the generation's VMEM budget.

    v7x-like (2 TCs): prefer an even grid with >=2 steps/core when each step
    still moves >=2 MiB; otherwise just keep the grid even; otherwise take the
    largest fitting tile.  v5e/v6e (1 TC): no grid constraint -- grid=1 with
    block_b=B is fine and maximizes the DMA chunk size.
    """
    per_col = (N + 2) * D * itemsize            # q + k + out bytes per batch column

    def fits(bb):
        return 2 * per_col * bb <= tile_budget  # double-buffered

    divs = _divisors(B)
    lane_divs = [d for d in divs if d % _LANE == 0 and fits(d)]
    any_divs = [d for d in divs if fits(d)]

    def pick(cands, pred):
        for bb in cands:                        # descending -> largest first
            if pred(bb):
                return bb
        return None

    if n_tc > 1 and lane_divs:
        preds = (
            lambda bb: (B // bb) % n_tc == 0 and (B // bb) >= 2 * n_tc
                       and per_col * bb >= _MIN_STEP_BYTES,
            lambda bb: (B // bb) % n_tc == 0,
            lambda bb: True,
        )
        for pred in preds:
            got = pick(lane_divs, pred)
            if got is not None:
                return got
    elif lane_divs:
        return lane_divs[0]

    # B has no 128-multiple divisor that fits the budget: fall back to the
    # largest *any* divisor that fits (masked output stores are acceptable).
    got = pick(any_divs, lambda bb: True)
    return got if got is not None else min(B, _LANE)


def _pick_inner_b(block_b):
    """Lane sub-tile width for in-kernel strip-mining (bounds vreg pressure)."""
    for cand in (256, 128):
        if block_b >= cand and block_b % cand == 0:
            return cand
    return block_b


# ---------------------------------------------------------------------------
# kernels
# ---------------------------------------------------------------------------

def _online_softmax_combine(q_ref, k_ref, col, width, *, scale, n_paths):
    """Single-pass online softmax over the query-path axis for one lane strip.

    Each k[n, :, col:col+width] slice is read from VMEM exactly once; the
    accumulator / max / denom are rescaled as new paths arrive.  All math f32.
    """
    q = q_ref[:, pl.ds(col, width)].astype(jnp.float32)                 # [D, w]

    k0 = k_ref[0, :, pl.ds(col, width)].astype(jnp.float32)             # [D, w]
    m = jnp.sum(q * k0, axis=0, keepdims=True) * scale                  # [1, w]
    l = jnp.ones_like(m)                                                 # exp(m - m) = 1
    acc = k0                                                             # 1 * k0

    for n in range(1, n_paths):
        kn = k_ref[n, :, pl.ds(col, width)].astype(jnp.float32)         # [D, w]
        s = jnp.sum(q * kn, axis=0, keepdims=True) * scale              # [1, w]
        m_new = jnp.maximum(m, s)
        alpha = jnp.exp(m - m_new)                                       # EUP
        p = jnp.exp(s - m_new)                                           # EUP
        l = alpha * l + p
        acc = alpha * acc + p * kn
        m = m_new

    inv = pl.reciprocal(l, approx=False)     # exact: mem-bound kernel, exactness is free
    return acc * inv                                                     # [D, w]


def _attn_kernel(q_ref, k_ref, o_ref, *, scale, n_paths, inner_b):
    n_inner = q_ref.shape[-1] // inner_b

    def body(t, carry):
        col = pl.multiple_of(t * inner_b, inner_b)
        combined = _online_softmax_combine(q_ref, k_ref, col, inner_b,
                                           scale=scale, n_paths=n_paths)
        o_ref[:, pl.ds(col, inner_b)] = combined.astype(o_ref.dtype)
        return carry

    lax.fori_loop(0, n_inner, body, 0)


def _attn_post_kernel(q_ref, k_ref, w_ref, b_ref, o_ref, *, scale, n_paths, inner_b):
    n_inner = q_ref.shape[-1] // inner_b

    def body(t, carry):
        col = pl.multiple_of(t * inner_b, inner_b)
        combined = _online_softmax_combine(q_ref, k_ref, col, inner_b,
                                           scale=scale, n_paths=n_paths)
        w = w_ref[...].astype(jnp.float32)                               # [D, D]
        b = b_ref[...].astype(jnp.float32)                               # [D, 1]
        linear = jnp.dot(w, combined, preferred_element_type=jnp.float32) + b
        o_ref[:, pl.ds(col, inner_b)] = linear.astype(o_ref.dtype)
        return carry

    lax.fori_loop(0, n_inner, body, 0)


# ---------------------------------------------------------------------------
# wrapper
# ---------------------------------------------------------------------------

def intersect_dotproduct_attention(query_embed, key_embeds, *, post_W=None,
                                   post_B=None, dotproduct_scaled=True,
                                   block_b=None, inner_b=None):
    """query_embed: [D, B], key_embeds: [N, D, B] -> [D, B] (dtype preserved;
    bf16 I/O supported, math is f32 in-kernel)."""
    D, B = query_embed.shape
    N, D2, B2 = key_embeds.shape
    assert D == D2 and B == B2
    itemsize = jnp.dtype(query_embed.dtype).itemsize

    tile_budget, vmem_limit_cap, n_tc = _hw_params()

    if block_b is None:
        block_b = _pick_block_b(B, N, D, itemsize, tile_budget, n_tc)
    assert B % block_b == 0, "block_b must divide batch_size"
    if inner_b is None:
        inner_b = _pick_inner_b(block_b)
    assert block_b % inner_b == 0, "inner_b must divide block_b"

    scale = (1.0 / math.sqrt(D)) if dotproduct_scaled else 1.0
    grid = (B // block_b,)

    q_spec = pl.BlockSpec((D, block_b), lambda b: (0, b))
    k_spec = pl.BlockSpec((N, D, block_b), lambda b: (0, 0, b))
    o_spec = pl.BlockSpec((D, block_b), lambda b: (0, b))

    # double-buffered streaming tiles (q + k + out) per grid step
    tile_bytes = 2 * (N + 2) * D * block_b * itemsize
    flops = N * B * (5 * D + 8) + D * B
    transcendentals = 2 * N * B + B
    bytes_accessed = (N + 2) * D * B * itemsize

    if post_W is None:
        kernel = functools.partial(_attn_kernel, scale=scale, n_paths=N,
                                   inner_b=inner_b)
        in_specs = [q_spec, k_spec]
        args = (query_embed, key_embeds)
    else:
        kernel = functools.partial(_attn_post_kernel, scale=scale, n_paths=N,
                                   inner_b=inner_b)
        # Constant index maps -> Pallas keeps post_W / post_B resident across
        # grid steps (no re-DMA).  D underfills the MXU rows; intentionally not
        # padded -- the matmul is a negligible fraction of this mem-bound kernel.
        in_specs = [q_spec, k_spec,
                    pl.BlockSpec((D, D), lambda b: (0, 0)),
                    pl.BlockSpec((D, 1), lambda b: (0, 0))]
        args = (query_embed, key_embeds, post_W, post_B)
        p_item = jnp.dtype(post_W.dtype).itemsize
        tile_bytes += 2 * (D * D + D) * p_item
        flops += 2 * D * D * B + D * B
        bytes_accessed += (D * D + D) * p_item

    vmem_limit = int(min(vmem_limit_cap, max(tile_bytes + (8 << 20), 16 << 20)))
    cost = pl.CostEstimate(flops=flops, transcendentals=transcendentals,
                           bytes_accessed=bytes_accessed)

    return pl.pallas_call(
        kernel,
        out_shape=jax.ShapeDtypeStruct((D, B), query_embed.dtype),
        grid_spec=pltpu.PrefetchScalarGridSpec(
            num_scalar_prefetch=0,
            grid=grid,
            in_specs=in_specs,
            out_specs=o_spec,
        ),
        compiler_params=pltpu.CompilerParams(
            dimension_semantics=("parallel",),          # megacore splits batch tiles (v7x)
            vmem_limit_bytes=vmem_limit),
        cost_estimate=cost,
    )(*args)


# ---------------------------------------------------------------------------
# reference + test
# ---------------------------------------------------------------------------

def _reference(query_embed, key_embeds, post_W=None, post_B=None,
               dotproduct_scaled=True):
    q = query_embed.astype(jnp.float32)
    k = key_embeds.astype(jnp.float32)
    D = q.shape[0]
    logits = jnp.sum(q[None] * k, axis=1)                      # [N, B]
    if dotproduct_scaled:
        logits = logits / math.sqrt(D)
    attn = jax.nn.softmax(logits, axis=0)
    combined = jnp.einsum('nb,ndb->db', attn, k)
    if post_W is not None:
        combined = post_W.astype(jnp.float32) @ combined + post_B.astype(jnp.float32)
    return combined


if __name__ == "__main__":
    # small shapes consistent with the module's forward:
    #   embed_dim D = 32, batch B = 256, num_query_path N = 8
    D, B, N = 32, 256, 8
    key = jax.random.PRNGKey(0)
    kq, kk, kw, kb = jax.random.split(key, 4)

    query_embed = jax.random.normal(kq, (D, B), jnp.float32)
    key_embeds = jax.random.normal(kk, (N, D, B), jnp.float32)

    # deterministic xavier_uniform init for the optional post-mat parameters
    bound_w = math.sqrt(6.0 / (D + D))
    post_W = jax.random.uniform(kw, (D, D), jnp.float32, -bound_w, bound_w)
    bound_b = math.sqrt(6.0 / (D + 1))
    post_B = jax.random.uniform(kb, (D, 1), jnp.float32, -bound_b, bound_b)

    tol_f32 = dict(atol=1e-4, rtol=1e-4)    # exact reciprocal now -> tight tolerance
    tol_bf16 = dict(atol=3e-2, rtol=3e-2)

    # default config: dotproduct_scaled=True, use_post_mat=False
    out = jax.block_until_ready(intersect_dotproduct_attention(query_embed, key_embeds))
    ref = _reference(query_embed, key_embeds)
    assert out.shape == (D, B)
    assert jnp.allclose(out, ref, **tol_f32)

    # use_post_mat=True config (fused post_W @ combined + post_B)
    out_post = jax.block_until_ready(
        intersect_dotproduct_attention(query_embed, key_embeds,
                                       post_W=post_W, post_B=post_B))
    ref_post = _reference(query_embed, key_embeds, post_W, post_B)
    assert jnp.allclose(out_post, ref_post, **tol_f32)

    # bf16 I/O (math stays f32 in-kernel) -- the big HBM-bytes lever
    q_bf = query_embed.astype(jnp.bfloat16)
    k_bf = key_embeds.astype(jnp.bfloat16)
    out_bf = jax.block_until_ready(intersect_dotproduct_attention(q_bf, k_bf))
    assert out_bf.dtype == jnp.bfloat16
    ref_bf = _reference(q_bf, k_bf)
    assert jnp.allclose(out_bf.astype(jnp.float32), ref_bf, **tol_bf16)

    # exercise the auto-picked larger batch tile / generation-aware grid
    B2 = 1024
    q2 = jax.random.normal(kq, (D, B2), jnp.float32)
    k2 = jax.random.normal(kk, (N, D, B2), jnp.float32)
    out2 = jax.block_until_ready(intersect_dotproduct_attention(q2, k2))
    assert jnp.allclose(out2, _reference(q2, k2), **tol_f32)

    print("KERNEL_OK")
</pallas_src>

<mosaic_0001>
module attributes {stable_mosaic.version = 11 : i64} {
  func.func @_attn_kernel(%arg0: i32, %arg1: memref<32x128xf32, #tpu.memory_space<vmem>>, %arg2: memref<8x32x128xf32, #tpu.memory_space<vmem>>, %arg3: memref<32x128xf32, #tpu.memory_space<vmem>>) attributes {dimension_semantics = [#tpu.dimension_semantics<parallel>], iteration_bounds = array<i64: 2>, scalar_prefetch = 0 : i64, scratch_operands = 0 : i64, tpu.core_type = #tpu.core_type<tc>, window_params = [{transform_indices = @transform_0, window_bounds = array<i64: 32, 128>}, {transform_indices = @transform_1, window_bounds = array<i64: 8, 32, 128>}, {transform_indices = @transform_2, window_bounds = array<i64: 32, 128>}]} {
    %c0_i32 = arith.constant 0 : i32
    %c128_i32 = arith.constant 128 : i32
    %0 = arith.muli %c0_i32, %c128_i32 : i32
    %1 = tpu.assume_multiple %0, 128 : i32
    %c0 = arith.constant 0 : index
    %2 = arith.index_cast %1 : i32 to index
    %3 = vector.load %arg1[%c0, %2] : memref<32x128xf32, #tpu.memory_space<vmem>>, vector<32x128xf32>
    %c0_0 = arith.constant 0 : index
    %c0_1 = arith.constant 0 : index
    %4 = arith.index_cast %1 : i32 to index
    %5 = vector.load %arg2[%c0_0, %c0_1, %4] : memref<8x32x128xf32, #tpu.memory_space<vmem>>, vector<1x32x128xf32>
    %6 = vector.shape_cast %5 : vector<1x32x128xf32> to vector<32x128xf32>
    %7 = arith.mulf %3, %6 : vector<32x128xf32>
    %cst = arith.constant dense<0.000000e+00> : vector<128xf32>
    %8 = vector.multi_reduction <add>, %7, %cst [0] : vector<32x128xf32> to vector<128xf32>
    %9 = vector.shape_cast %8 : vector<128xf32> to vector<1x128xf32>
    %cst_2 = arith.constant 0.176776692 : f32
    %10 = vector.broadcast %cst_2 : f32 to vector<1x128xf32>
    %11 = arith.mulf %9, %10 : vector<1x128xf32>
    %cst_3 = arith.constant 1.000000e+00 : f32
    %12 = vector.broadcast %cst_3 : f32 to vector<1x128xf32>
    %c1 = arith.constant 1 : index
    %c0_4 = arith.constant 0 : index
    %13 = arith.index_cast %1 : i32 to index
    %14 = vector.load %arg2[%c1, %c0_4, %13] : memref<8x32x128xf32, #tpu.memory_space<vmem>>, vector<1x32x128xf32>
    %15 = vector.shape_cast %14 : vector<1x32x128xf32> to vector<32x128xf32>
    %16 = arith.mulf %3, %15 : vector<32x128xf32>
    %cst_5 = arith.constant dense<0.000000e+00> : vector<128xf32>
    %17 = vector.multi_reduction <add>, %16, %cst_5 [0] : vector<32x128xf32> to vector<128xf32>
    %18 = vector.shape_cast %17 : vector<128xf32> to vector<1x128xf32>
    %cst_6 = arith.constant 0.176776692 : f32
    %19 = vector.broadcast %cst_6 : f32 to vector<1x128xf32>
    %20 = arith.mulf %18, %19 : vector<1x128xf32>
    %21 = arith.maximumf %11, %20 : vector<1x128xf32>
    %22 = arith.subf %11, %21 : vector<1x128xf32>
    %23 = math.exp %22 : vector<1x128xf32>
    %24 = arith.subf %20, %21 : vector<1x128xf32>
    %25 = math.exp %24 : vector<1x128xf32>
    %26 = arith.mulf %23, %12 : vector<1x128xf32>
    %27 = arith.addf %26, %25 : vector<1x128xf32>
    %28 = vector.broadcast %23 : vector<1x128xf32> to vector<32x128xf32>
    %29 = arith.mulf %28, %6 : vector<32x128xf32>
    %30 = vector.broadcast %25 : vector<1x128xf32> to vector<32x128xf32>
    %31 = arith.mulf %30, %15 : vector<32x128xf32>
    %32 = arith.addf %29, %31 : vector<32x128xf32>
    %c2 = arith.constant 2 : index
    %c0_7 = arith.constant 0 : index
    %33 = arith.index_cast %1 : i32 to index
    %34 = vector.load %arg2[%c2, %c0_7, %33] : memref<8x32x128xf32, #tpu.memory_space<vmem>>, vector<1x32x128xf32>
    %35 = vector.shape_cast %34 : vector<1x32x128xf32> to vector<32x128xf32>
    %36 = arith.mulf %3, %35 : vector<32x128xf32>
    %cst_8 = arith.constant dense<0.000000e+00> : vector<128xf32>
    %37 = vector.multi_reduction <add>, %36, %cst_8 [0] : vector<32x128xf32> to vector<128xf32>
    %38 = vector.shape_cast %37 : vector<128xf32> to vector<1x128xf32>
    %cst_9 = arith.constant 0.176776692 : f32
    %39 = vector.broadcast %cst_9 : f32 to vector<1x128xf32>
    %40 = arith.mulf %38, %39 : vector<1x128xf32>
    %41 = arith.maximumf %21, %40 : vector<1x128xf32>
    %42 = arith.subf %21, %41 : vector<1x128xf32>
    %43 = math.exp %42 : vector<1x128xf32>
    %44 = arith.subf %40, %41 : vector<1x128xf32>
    %45 = math.exp %44 : vector<1x128xf32>
    %46 = arith.mulf %43, %27 : vector<1x128xf32>
    %47 = arith.addf %46, %45 : vector<1x128xf32>
    %48 = vector.broadcast %43 : vector<1x128xf32> to vector<32x128xf32>
    %49 = arith.mulf %48, %32 : vector<32x128xf32>
    %50 = vector.broadcast %45 : vector<1x128xf32> to vector<32x128xf32>
    %51 = arith.mulf %50, %35 : vector<32x128xf32>
    %52 = arith.addf %49, %51 : vector<32x128xf32>
    %c3 = arith.constant 3 : index
    %c0_10 = arith.constant 0 : index
    %53 = arith.index_cast %1 : i32 to index
    %54 = vector.load %arg2[%c3, %c0_10, %53] : memref<8x32x128xf32, #tpu.memory_space<vmem>>, vector<1x32x128xf32>
    %55 = vector.shape_cast %54 : vector<1x32x128xf32> to vector<32x128xf32>
    %56 = arith.mulf %3, %55 : vector<32x128xf32>
    %cst_11 = arith.constant dense<0.000000e+00> : vector<128xf32>
    %57 = vector.multi_reduction <add>, %56, %cst_11 [0] : vector<32x128xf32> to vector<128xf32>
    %58 = vector.shape_cast %57 : vector<128xf32> to vector<1x128xf32>
    %cst_12 = arith.constant 0.176776692 : f32
    %59 = vector.broadcast %cst_12 : f32 to vector<1x128xf32>
    %60 = arith.mulf %58, %59 : vector<1x128xf32>
    %61 = arith.maximumf %41, %60 : vector<1x128xf32>
    %62 = arith.subf %41, %61 : vector<1x128xf32>
    %63 = math.exp %62 : vector<1x128xf32>
    %64 = arith.subf %60, %61 : vector<1x128xf32>
    %65 = math.exp %64 : vector<1x128xf32>
    %66 = arith.mulf %63, %47 : vector<1x128xf32>
    %67 = arith.addf %66, %65 : vector<1x128xf32>
    %68 = vector.broadcast %63 : vector<1x128xf32> to vector<32x128xf32>
    %69 = arith.mulf %68, %52 : vector<32x128xf32>
    %70 = vector.broadcast %65 : vector<1x128xf32> to vector<32x128xf32>
    %71 = arith.mulf %70, %55 : vector<32x128xf32>
    %72 = arith.addf %69, %71 : vector<32x128xf32>
    %c4 = arith.constant 4 : index
    %c0_13 = arith.constant 0 : index
    %73 = arith.index_cast %1 : i32 to index
    %74 = vector.load %arg2[%c4, %c0_13, %73] : memref<8x32x128xf32, #tpu.memory_space<vmem>>, vector<1x32x128xf32>
    %75 = vector.shape_cast %74 : vector<1x32x128xf32> to vector<32x128xf32>
    %76 = arith.mulf %3, %75 : vector<32x128xf32>
    %cst_14 = arith.constant dense<0.000000e+00> : vector<128xf32>
    %77 = vector.multi_reduction <add>, %76, %cst_14 [0] : vector<32x128xf32> to vector<128xf32>
    %78 = vector.shape_cast %77 : vector<128xf32> to vector<1x128xf32>
    %cst_15 = arith.constant 0.176776692 : f32
    %79 = vector.broadcast %cst_15 : f32 to vector<1x128xf32>
    %80 = arith.mulf %78, %79 : vector<1x128xf32>
    %81 = arith.maximumf %61, %80 : vector<1x128xf32>
    %82 = arith.subf %61, %81 : vector<1x128xf32>
    %83 = math.exp %82 : vector<1x128xf32>
    %84 = arith.subf %80, %81 : vector<1x128xf32>
    %85 = math.exp %84 : vector<1x128xf32>
    %86 = arith.mulf %83, %67 : vector<1x128xf32>
    %87 = arith.addf %86, %85 : vector<1x128xf32>
    %88 = vector.broadcast %83 : vector<1x128xf32> to vector<32x128xf32>
    %89 = arith.mulf %88, %72 : vector<32x128xf32>
    %90 = vector.broadcast %85 : vector<1x128xf32> to vector<32x128xf32>
    %91 = arith.mulf %90, %75 : vector<32x128xf32>
    %92 = arith.addf %89, %91 : vector<32x128xf32>
    %c5 = arith.constant 5 : index
    %c0_16 = arith.constant 0 : index
    %93 = arith.index_cast %1 : i32 to index
    %94 = vector.load %arg2[%c5, %c0_16, %93] : memref<8x32x128xf32, #tpu.memory_space<vmem>>, vector<1x32x128xf32>
    %95 = vector.shape_cast %94 : vector<1x32x128xf32> to vector<32x128xf32>
    %96 = arith.mulf %3, %95 : vector<32x128xf32>
    %cst_17 = arith.constant dense<0.000000e+00> : vector<128xf32>
    %97 = vector.multi_reduction <add>, %96, %cst_17 [0] : vector<32x128xf32> to vector<128xf32>
    %98 = vector.shape_cast %97 : vector<128xf32> to vector<1x128xf32>
    %cst_18 = arith.constant 0.176776692 : f32
    %99 = vector.broadcast %cst_18 : f32 to vector<1x128xf32>
    %100 = arith.mulf %98, %99 : vector<1x128xf32>
    %101 = arith.maximumf %81, %100 : vector<1x128xf32>
    %102 = arith.subf %81, %101 : vector<1x128xf32>
    %103 = math.exp %102 : vector<1x128xf32>
    %104 = arith.subf %100, %101 : vector<1x128xf32>
    %105 = math.exp %104 : vector<1x128xf32>
    %106 = arith.mulf %103, %87 : vector<1x128xf32>
    %107 = arith.addf %106, %105 : vector<1x128xf32>
    %108 = vector.broadcast %103 : vector<1x128xf32> to vector<32x128xf32>
    %109 = arith.mulf %108, %92 : vector<32x128xf32>
    %110 = vector.broadcast %105 : vector<1x128xf32> to vector<32x128xf32>
    %111 = arith.mulf %110, %95 : vector<32x128xf32>
    %112 = arith.addf %109, %111 : vector<32x128xf32>
    %c6 = arith.constant 6 : index
    %c0_19 = arith.constant 0 : index
    %113 = arith.index_cast %1 : i32 to index
    %114 = vector.load %arg2[%c6, %c0_19, %113] : memref<8x32x128xf32, #tpu.memory_space<vmem>>, vector<1x32x128xf32>
    %115 = vector.shape_cast %114 : vector<1x32x128xf32> to vector<32x128xf32>
    %116 = arith.mulf %3, %115 : vector<32x128xf32>
    %cst_20 = arith.constant dense<0.000000e+00> : vector<128xf32>
    %117 = vector.multi_reduction <add>, %116, %cst_20 [0] : vector<32x128xf32> to vector<128xf32>
    %118 = vector.shape_cast %117 : vector<128xf32> to vector<1x128xf32>
    %cst_21 = arith.constant 0.176776692 : f32
    %119 = vector.broadcast %cst_21 : f32 to vector<1x128xf32>
    %120 = arith.mulf %118, %119 : vector<1x128xf32>
    %121 = arith.maximumf %101, %120 : vector<1x128xf32>
    %122 = arith.subf %101, %121 : vector<1x128xf32>
    %123 = math.exp %122 : vector<1x128xf32>
    %124 = arith.subf %120, %121 : vector<1x128xf32>
    %125 = math.exp %124 : vector<1x128xf32>
    %126 = arith.mulf %123, %107 : vector<1x128xf32>
    %127 = arith.addf %126, %125 : vector<1x128xf32>
    %128 = vector.broadcast %123 : vector<1x128xf32> to vector<32x128xf32>
    %129 = arith.mulf %128, %112 : vector<32x128xf32>
    %130 = vector.broadcast %125 : vector<1x128xf32> to vector<32x128xf32>
    %131 = arith.mulf %130, %115 : vector<32x128xf32>
    %132 = arith.addf %129, %131 : vector<32x128xf32>
    %c7 = arith.constant 7 : index
    %c0_22 = arith.constant 0 : index
    %133 = arith.index_cast %1 : i32 to index
    %134 = vector.load %arg2[%c7, %c0_22, %133] : memref<8x32x128xf32, #tpu.memory_space<vmem>>, vector<1x32x128xf32>
    %135 = vector.shape_cast %134 : vector<1x32x128xf32> to vector<32x128xf32>
    %136 = arith.mulf %3, %135 : vector<32x128xf32>
    %cst_23 = arith.constant dense<0.000000e+00> : vector<128xf32>
    %137 = vector.multi_reduction <add>, %136, %cst_23 [0] : vector<32x128xf32> to vector<128xf32>
    %138 = vector.shape_cast %137 : vector<128xf32> to vector<1x128xf32>
    %cst_24 = arith.constant 0.176776692 : f32
    %139 = vector.broadcast %cst_24 : f32 to vector<1x128xf32>
    %140 = arith.mulf %138, %139 : vector<1x128xf32>
    %141 = arith.maximumf %121, %140 : vector<1x128xf32>
    %142 = arith.subf %121, %141 : vector<1x128xf32>
    %143 = math.exp %142 : vector<1x128xf32>
    %144 = arith.subf %140, %141 : vector<1x128xf32>
    %145 = math.exp %144 : vector<1x128xf32>
    %146 = arith.mulf %143, %127 : vector<1x128xf32>
    %147 = arith.addf %146, %145 : vector<1x128xf32>
    %148 = vector.broadcast %143 : vector<1x128xf32> to vector<32x128xf32>
    %149 = arith.mulf %148, %132 : vector<32x128xf32>
    %150 = vector.broadcast %145 : vector<1x128xf32> to vector<32x128xf32>
    %151 = arith.mulf %150, %135 : vector<32x128xf32>
    %152 = arith.addf %149, %151 : vector<32x128xf32>
    %153 = tpu.reciprocal %147 : vector<1x128xf32> -> vector<1x128xf32>
    %154 = vector.broadcast %153 : vector<1x128xf32> to vector<32x128xf32>
    %155 = arith.mulf %152, %154 : vector<32x128xf32>
    %c0_25 = arith.constant 0 : index
    %156 = arith.index_cast %1 : i32 to index
    %157 = vector.load %arg3[%c0_25, %156] : memref<32x128xf32, #tpu.memory_space<vmem>>, vector<32x128xf32>
    tpu.vector_store %arg3[%c0_25, %156], %155 {strides = array<i32>} : memref<32x128xf32, #tpu.memory_space<vmem>>, vector<32x128xf32>,
    %c1_i32 = arith.constant 1 : i32
    return
  }
  func.func @transform_0(%arg0: i32) -> (i32, i32) {
    %c0_i32 = arith.constant 0 : i32
    %c0_i32_0 = arith.constant 0 : i32
    return %c0_i32, %arg0 : i32, i32
  }
  func.func @transform_1(%arg0: i32) -> (i32, i32, i32) {
    %c0_i32 = arith.constant 0 : i32
    %c0_i32_0 = arith.constant 0 : i32
    %c0_i32_1 = arith.constant 0 : i32
    return %c0_i32, %c0_i32_0, %arg0 : i32, i32, i32
  }
  func.func @transform_2(%arg0: i32) -> (i32, i32) {
    %c0_i32 = arith.constant 0 : i32
    %c0_i32_0 = arith.constant 0 : i32
    return %c0_i32, %arg0 : i32, i32
  }
}

</mosaic_0001>

<llo_original>
// kernel: tpu_custom_call.1
$region0: #{tpu_custom_call.1}
  #allocation0 [shape = 'u32[]', space=smem, size = 0x4, offset = 0x4, fixed_abs, tag = 'smem constant byte address 0x4 - core index']
  #allocation1 [shape = 'u32[144,128]{1,0:T(1,128)}', space=vmem, size = 0x12000, scoped, tag = 'internal scratch']
  %s0 = inlined_call_operand.hbm [shape: f32[32,256], index: 0, kind: input, shape index: {}]
  %s1 = inlined_call_operand.hbm [shape: f32[8,32,256], index: 1, kind: input, shape index: {}]
  %s2 = inlined_call_operand.hbm [shape: f32[32,256], index: 2, kind: output, shape index: {}]
  %s3 = sld [smem:[#allocation0]]
  $region49: #{tpu_custom_call.1} parent=0
    _
  %s5 = ssub.s32 1, %s3
  %s6 = scalar_select 0, %s5, %s3
  $region1: #{tpu_custom_call.1} parent=0
    #allocation2 [shape = 'u8[32768]{0}', space=vmem, size = 0x8000, scoped, tag = 'input window, operand 0']
    #allocation3 [shape = 's32[2]{0}', space=sflag, size = 0x8, scoped, tag = 'scoped memory for tpu_custom_call.1']
    #allocation4 [shape = 's32[2]{0}', space=sflag, size = 0x8, scoped, tag = 'scoped memory for tpu_custom_call.1']
    #allocation5 [shape = 'u8[262144]{0}', space=vmem, size = 0x40000, scoped, tag = 'input window, operand 1']
    #allocation6 [shape = 's32[2]{0}', space=sflag, size = 0x8, scoped, tag = 'scoped memory for tpu_custom_call.1']
    #allocation7 [shape = 'u8[32768]{0}', space=vmem, size = 0x8000, scoped, tag = 'output window, operand 0']
    %7 = vsyncpa [#allocation3], 0
    %s8 = scalar_lea.sflag [#allocation3], 1
    %9 = vsyncpa %s8, 0
    %10 = vsyncpa [#allocation6], 0
    %s11 = scalar_lea.sflag [#allocation6], 1
    %12 = vsyncpa %s11, 0
    %13 = vsyncpa [#allocation4], 0
    %s14 = scalar_lea.sflag [#allocation4], 1
    %15 = vsyncpa %s14, 0
    loop: start=0, step=1, limit=4
    $region2: #{tpu_custom_call.1} parent=1 // loop_pre_header
      _
    $region3: #{tpu_custom_call.1} parent=1 // loop_header
      %s17 = sphi 0, %s21
      %p18 = scmp.ge.s32.totalorder %s17, 4
      %s27 = sphi 0, %s29
      %s30 = sphi 0, %s27
      %s31 = sphi 0, %s30
      %s47 = sphi 0, %s31
      %s53 = sphi 0, %s55
      %s56 = sphi 0, %s53
      %s57 = sphi 0, %s56
      %s73 = sphi 0, %s57
      %s79 = sphi 0, %s81
      %s82 = sphi 0, %s79
      %s83 = sphi 0, %s82
      %s99 = sphi 0, %s83
    $region4: #{tpu_custom_call.1} parent=1 // loop_header_branch
      %20 = sbr.rel (%p18) target = $region8
    $region5: #{tpu_custom_call.1} parent=1 // loop_body
      %s22 = ssub.s32 %s17, 1
      %s23 = ssub.s32 %s17, 2
      %s24 = sadd.s32 %s17, 1
      %s25 = ssub.s32 %s17, %s24
      %p26 = scmp.eq.s32.totalorder %s25, 0
      %s28 = sadd.s32 %s27, 1
      %s29 = scalar_select %p26, %s27, %s28
      %p32 = pneg %p26
      %p33 = scmp.eq.s32.totalorder %s17, 1
      %p34 = por %p32, %p33
      %p35 = scmp.ne.s32.totalorder %s27, %s30
      %p36 = scmp.eq.s32.totalorder %s17, 0
      %p37 = por %p35, %p36
      %p38 = scmp.ne.s32.totalorder %s27, %s30
      %p39 = scmp.eq.s32.totalorder %s22, 1
      %p40 = por %p38, %p39
      %p41 = scmp.ne.s32.totalorder %s30, %s31
      %p42 = scmp.eq.s32.totalorder %s22, 0
      %p43 = por %p41, %p42
      %p44 = scmp.ne.s32.totalorder %s30, %s31
      %p45 = scmp.eq.s32.totalorder %s23, 1
      %p46 = por %p44, %p45
      %p48 = scmp.ne.s32.totalorder %s31, %s47
      %p49 = scmp.eq.s32.totalorder %s23, 0
      %p50 = por %p48, %p49
      %s51 = ssub.s32 %s17, %s24
      %p52 = scmp.eq.s32.totalorder %s51, 0
      %s54 = sadd.s32 %s53, 1
      %s55 = scalar_select %p52, %s53, %s54
      %p58 = pneg %p52
      %p59 = scmp.eq.s32.totalorder %s17, 1
      %p60 = por %p58, %p59
      %p61 = scmp.ne.s32.totalorder %s53, %s56
      %p62 = scmp.eq.s32.totalorder %s17, 0
      %p63 = por %p61, %p62
      %p64 = scmp.ne.s32.totalorder %s53, %s56
      %p65 = scmp.eq.s32.totalorder %s22, 1
      %p66 = por %p64, %p65
      %p67 = scmp.ne.s32.totalorder %s56, %s57
      %p68 = scmp.eq.s32.totalorder %s22, 0
      %p69 = por %p67, %p68
      %p70 = scmp.ne.s32.totalorder %s56, %s57
      %p71 = scmp.eq.s32.totalorder %s23, 1
      %p72 = por %p70, %p71
      %p74 = scmp.ne.s32.totalorder %s57, %s73
      %p75 = scmp.eq.s32.totalorder %s23, 0
      %p76 = por %p74, %p75
      %s77 = ssub.s32 %s17, %s24
      %p78 = scmp.eq.s32.totalorder %s77, 0
      %s80 = sadd.s32 %s79, 1
      %s81 = scalar_select %p78, %s79, %s80
      %p84 = pneg %p78
      %p85 = scmp.eq.s32.totalorder %s17, 1
      %p86 = por %p84, %p85
      %p87 = scmp.ne.s32.totalorder %s79, %s82
      %p88 = scmp.eq.s32.totalorder %s17, 0
      %p89 = por %p87, %p88
      %p90 = scmp.ne.s32.totalorder %s79, %s82
      %p91 = scmp.eq.s32.totalorder %s22, 1
      %p92 = por %p90, %p91
      %p93 = scmp.ne.s32.totalorder %s82, %s83
      %p94 = scmp.eq.s32.totalorder %s22, 0
      %p95 = por %p93, %p94
      %p96 = scmp.ne.s32.totalorder %s82, %s83
      %p97 = scmp.eq.s32.totalorder %s23, 1
      %p98 = por %p96, %p97
      %p100 = scmp.ne.s32.totalorder %s83, %s99
      %p101 = scmp.eq.s32.totalorder %s23, 0
      %p102 = por %p100, %p101
      %p103 = scmp.le.s32.totalorder 1, %s17
      %p104 = scmp.lt.s32.totalorder %s17, 3
      %p105 = pnand %p103, %p104
      %p106 = pneg %p105
      // Predicated region
      $region9: #{tpu_custom_call.1} parent=5 // pred_check
        _
      $region10: #{tpu_custom_call.1} parent=5 // pred_check_branch
        %108 = sbr.rel (%p105) target = $region12
      $region11: #{tpu_custom_call.1} parent=5 // pred_region
        %s109 = ssub.s32 %s17, 1
      $region12: #{tpu_custom_call.1} parent=5 // pred_fallthru
        _
      %p110 = scmp.lt.s32.totalorder %s17, 2
      // Predicated region
      $region13: #{tpu_custom_call.1} parent=5 // pred_check
        %p111 = pneg %p110
      $region14: #{tpu_custom_call.1} parent=5 // pred_check_branch
        %113 = sbr.rel (%p111) target = $region16
      $region15: #{tpu_custom_call.1} parent=5 // pred_region
        // Predicated region
        $region17: #{tpu_custom_call.1} parent=15 // pred_check
          %p114 = pneg %p37
        $region18: #{tpu_custom_call.1} parent=15 // pred_check_branch
          %116 = sbr.rel (%p114) target = $region20
        $region19: #{tpu_custom_call.1} parent=15 // pred_region
          %s117 = sand.u32 %s27, 1
          %s118 = scalar_lea.sflag [#allocation3], %s117
          %s119 = sand.u32 %s27, 1
          %s120 = smul.addr %s119, 32
          %s121 = scalar_lea.vmem [#allocation2], %s120
          %s123 = ssub.s32 512, 512
          %124 = vsyncadd %s118, %s123
          %s125 = smul.addr %s17, 128
          %s126 = scalar_lea.hbm %s0, %s125
          %s127 = sshll.u32 %s121, 4
          %s128 = int_to_ptr.vmem [resolvable:$true] %s127
          %133 = dma.hbm_to_vmem [thread:$0]  %s126, 512, %s128, %s118, 256, 128, 8
        $region20: #{tpu_custom_call.1} parent=15 // pred_fallthru
          _
        // Predicated region
        $region21: #{tpu_custom_call.1} parent=15 // pred_check
          %p134 = pneg %p63
        $region22: #{tpu_custom_call.1} parent=15 // pred_check_branch
          %136 = sbr.rel (%p134) target = $region24
        $region23: #{tpu_custom_call.1} parent=15 // pred_region
          %s137 = sand.u32 %s53, 1
          %s138 = scalar_lea.sflag [#allocation6], %s137
          %s139 = sand.u32 %s53, 1
          %s140 = smul.addr %s139, 256
          %s141 = scalar_lea.vmem [#allocation5], %s140
          %s143 = ssub.s32 4096, 4096
          %144 = vsyncadd %s138, %s143
          %s145 = smul.addr %s17, 128
          %s146 = scalar_lea.hbm %s1, %s145
          %s147 = sshll.u32 %s141, 4
          %s148 = int_to_ptr.vmem [resolvable:$true] %s147
          %153 = dma.hbm_to_vmem [thread:$0]  %s146, 4096, %s148, %s138, 256, 128, 8
        $region24: #{tpu_custom_call.1} parent=15 // pred_fallthru
          _
      $region16: #{tpu_custom_call.1} parent=5 // pred_fallthru
        _
      %p154 = scmp.le.s32.totalorder 1, %s17
      %p155 = scmp.lt.s32.totalorder %s17, 3
      %p156 = pnand %p154, %p155
      %p157 = pneg %p156
      // Predicated region
      $region25: #{tpu_custom_call.1} parent=5 // pred_check
        _
      $region26: #{tpu_custom_call.1} parent=5 // pred_check_branch
        %159 = sbr.rel (%p156) target = $region28
      $region27: #{tpu_custom_call.1} parent=5 // pred_region
        %s160 = ssub.s32 %s17, 1
        %s161 = sand.u32 %s30, 1
        %s162 = scalar_lea.sflag [#allocation3], %s161
        %s163 = sand.u32 %s30, 1
        %s164 = smul.addr %s163, 32
        %s165 = scalar_lea.vmem [#allocation2], %s164
        // Predicated region
        $region29: #{tpu_custom_call.1} parent=27 // pred_check
          %p166 = pneg %p43
        $region30: #{tpu_custom_call.1} parent=27 // pred_check_branch
          %168 = sbr.rel (%p166) target = $region32
        $region31: #{tpu_custom_call.1} parent=27 // pred_region
          %169 = dma.done %s162, 512
        $region32: #{tpu_custom_call.1} parent=27 // pred_fallthru
          _
        %s170 = sand.u32 %s56, 1
        %s171 = scalar_lea.sflag [#allocation6], %s170
        %s172 = sand.u32 %s56, 1
        %s173 = smul.addr %s172, 256
        %s174 = scalar_lea.vmem [#allocation5], %s173
        // Predicated region
        $region33: #{tpu_custom_call.1} parent=27 // pred_check
          %p175 = pneg %p69
        $region34: #{tpu_custom_call.1} parent=27 // pred_check_branch
          %177 = sbr.rel (%p175) target = $region36
        $region35: #{tpu_custom_call.1} parent=27 // pred_region
          %178 = dma.done %s171, 4096
        $region36: #{tpu_custom_call.1} parent=27 // pred_fallthru
          _
        %s179 = sand.u32 %s30, 1
        %s180 = scalar_lea.sflag [#allocation3], %s179
        %s181 = sand.u32 %s30, 1
        %s182 = smul.addr %s181, 32
        %s183 = scalar_lea.vmem [#allocation2], %s182
        %p184 = pneg %p43
        %p185 = pneg %p40
        %s186 = sand.u32 %s56, 1
        %s187 = scalar_lea.sflag [#allocation6], %s186
        %s188 = sand.u32 %s56, 1
        %s189 = smul.addr %s188, 256
        %s190 = scalar_lea.vmem [#allocation5], %s189
        %p191 = pneg %p69
        %p192 = pneg %p66
        %p193 = pneg %p95
        %p194 = pneg %p92
        %s195 = sand.u32 %s82, 1
        %s196 = scalar_lea.sflag [#allocation4], %s195
        %s197 = sand.u32 %s82, 1
        %s198 = smul.addr %s197, 32
        %s199 = scalar_lea.vmem [#allocation7], %s198
        %v200 = vld [vmem:[%s165] sm:$0xff]
        %v201 = vld [vmem:[%s165 + $0x8] sm:$0xff]
        %v202 = vld [vmem:[%s165 + $0x10] sm:$0xff]
        %v203 = vld [vmem:[%s165 + $0x18] sm:$0xff]
        %v204 = vld [vmem:[%s174] sm:$0xff]
        %v205 = vld [vmem:[%s174 + $0x8] sm:$0xff]
        %v206 = vld [vmem:[%s174 + $0x10] sm:$0xff]
        %v207 = vld [vmem:[%s174 + $0x18] sm:$0xff]
        %v208 = vmul.f32 %v200, %v204
        %v209 = vmul.f32 %v201, %v205
        %v210 = vmul.f32 %v202, %v206
        %v211 = vmul.f32 %v203, %v207
        %v212 = vadd.f32 %v208, %v209
        %v213 = vadd.f32 %v212, %v210
        %v214 = vadd.f32 %v213, %v211
        %v215 = vrot.slane %v214, 4
        %v216 = vadd.f32 %v214, %v215
        %v217 = vrot.slane %v216, 2
        %v218 = vadd.f32 %v216, %v217
        %v219 = vrot.slane %v218, 1
        %v220 = vadd.f32 %v218, %v219
        %v221 = vmul.f32 %v220, 0.17677669
        %s222 = sadd.s32 0, 32
        %s223 = scalar_lea.vmem %s174, %s222 [#allocation5]
        %v224 = vld [vmem:[%s223] sm:$0xff]
        %v225 = vld [vmem:[%s223 + $0x8] sm:$0xff]
        %v226 = vld [vmem:[%s223 + $0x10] sm:$0xff]
        %v227 = vld [vmem:[%s223 + $0x18] sm:$0xff]
        %v228 = vmul.f32 %v200, %v224
        %v229 = vmul.f32 %v201, %v225
        %v230 = vmul.f32 %v202, %v226
        %v231 = vmul.f32 %v203, %v227
        %v232 = vadd.f32 %v228, %v229
        %v233 = vadd.f32 %v232, %v230
        %v234 = vadd.f32 %v233, %v231
        %v235 = vrot.slane %v234, 4
        %v236 = vadd.f32 %v234, %v235
        %v237 = vrot.slane %v236, 2
        %v238 = vadd.f32 %v236, %v237
        %v239 = vrot.slane %v238, 1
        %v240 = vadd.f32 %v238, %v239
        %v241 = vmul.f32 %v240, 0.17677669
        %v242 = vmax.f32 %v221, %v241
        %v243 = vsub.f32 %v221, %v242
        %v244 = vmul.f32 %v243, 1.442695
        %v245 = vpow.pop %v244
        %v246 = vsub.f32 %v241, %v242
        %v247 = vmul.f32 %v246, 1.442695
        %v248 = vpow.pop %v247
        %v249 = vadd.f32 %v245, %v248
        %v250 = vmul.f32 %v245, %v204
        %v251 = vmul.f32 %v245, %v205
        %v252 = vmul.f32 %v245, %v206
        %v253 = vmul.f32 %v245, %v207
        %v254 = vmul.f32 %v248, %v224
        %v255 = vmul.f32 %v248, %v225
        %v256 = vmul.f32 %v248, %v226
        %v257 = vmul.f32 %v248, %v227
        %v258 = vadd.f32 %v250, %v254
        %v259 = vadd.f32 %v251, %v255
        %v260 = vadd.f32 %v252, %v256
        %v261 = vadd.f32 %v253, %v257
        %s262 = sadd.s32 0, 64
        %s263 = scalar_lea.vmem %s174, %s262 [#allocation5]
        %v264 = vld [vmem:[%s263] sm:$0xff]
        %v265 = vld [vmem:[%s263 + $0x8] sm:$0xff]
        %v266 = vld [vmem:[%s263 + $0x10] sm:$0xff]
        %v267 = vld [vmem:[%s263 + $0x18] sm:$0xff]
        %v268 = vmul.f32 %v200, %v264
        %v269 = vmul.f32 %v201, %v265
        %v270 = vmul.f32 %v202, %v266
        %v271 = vmul.f32 %v203, %v267
        %v272 = vadd.f32 %v268, %v269
        %v273 = vadd.f32 %v272, %v270
        %v274 = vadd.f32 %v273, %v271
        %v275 = vrot.slane %v274, 4
        %v276 = vadd.f32 %v274, %v275
        %v277 = vrot.slane %v276, 2
        %v278 = vadd.f32 %v276, %v277
        %v279 = vrot.slane %v278, 1
        %v280 = vadd.f32 %v278, %v279
        %v281 = vmul.f32 %v280, 0.17677669
        %v282 = vmax.f32 %v242, %v281
        %v283 = vsub.f32 %v242, %v282
        %v284 = vmul.f32 %v283, 1.442695
        %v285 = vpow.pop %v284
        %v286 = vsub.f32 %v281, %v282
        %v287 = vmul.f32 %v286, 1.442695
        %v288 = vpow.pop %v287
        %v289 = vmul.f32 %v285, %v249
        %v290 = vadd.f32 %v289, %v288
        %v291 = vmul.f32 %v285, %v258
        %v292 = vmul.f32 %v285, %v259
        %v293 = vmul.f32 %v285, %v260
        %v294 = vmul.f32 %v285, %v261
        %v295 = vmul.f32 %v288, %v264
        %v296 = vmul.f32 %v288, %v265
        %v297 = vmul.f32 %v288, %v266
        %v298 = vmul.f32 %v288, %v267
        %v299 = vadd.f32 %v291, %v295
        %v300 = vadd.f32 %v292, %v296
        %v301 = vadd.f32 %v293, %v297
        %v302 = vadd.f32 %v294, %v298
        %s303 = sadd.s32 0, 96
        %s304 = scalar_lea.vmem %s174, %s303 [#allocation5]
        %v305 = vld [vmem:[%s304] sm:$0xff]
        %v306 = vld [vmem:[%s304 + $0x8] sm:$0xff]
        %v307 = vld [vmem:[%s304 + $0x10] sm:$0xff]
        %v308 = vld [vmem:[%s304 + $0x18] sm:$0xff]
        %v309 = vmul.f32 %v200, %v305
        %v310 = vmul.f32 %v201, %v306
        %v311 = vmul.f32 %v202, %v307
        %v312 = vmul.f32 %v203, %v308
        %v313 = vadd.f32 %v309, %v310
        %v314 = vadd.f32 %v313, %v311
        %v315 = vadd.f32 %v314, %v312
        %v316 = vrot.slane %v315, 4
        %v317 = vadd.f32 %v315, %v316
        %v318 = vrot.slane %v317, 2
        %v319 = vadd.f32 %v317, %v318
        %v320 = vrot.slane %v319, 1
        %v321 = vadd.f32 %v319, %v320
        %v322 = vmul.f32 %v321, 0.17677669
        %v323 = vmax.f32 %v282, %v322
        %v324 = vsub.f32 %v282, %v323
        %v325 = vmul.f32 %v324, 1.442695
        %v326 = vpow.pop %v325
        %v327 = vsub.f32 %v322, %v323
        %v328 = vmul.f32 %v327, 1.442695
        %v329 = vpow.pop %v328
        %v330 = vmul.f32 %v326, %v290
        %v331 = vadd.f32 %v330, %v329
        %v332 = vmul.f32 %v326, %v299
        %v333 = vmul.f32 %v326, %v300
        %v334 = vmul.f32 %v326, %v301
        %v335 = vmul.f32 %v326, %v302
        %v336 = vmul.f32 %v329, %v305
        %v337 = vmul.f32 %v329, %v306
        %v338 = vmul.f32 %v329, %v307
        %v339 = vmul.f32 %v329, %v308
        %v340 = vadd.f32 %v332, %v336
        %v341 = vadd.f32 %v333, %v337
        %v342 = vadd.f32 %v334, %v338
        %v343 = vadd.f32 %v335, %v339
        %s344 = sadd.s32 0, 128
        %s345 = scalar_lea.vmem %s174, %s344 [#allocation5]
        %v346 = vld [vmem:[%s345] sm:$0xff]
        %v347 = vld [vmem:[%s345 + $0x8] sm:$0xff]
        %v348 = vld [vmem:[%s345 + $0x10] sm:$0xff]
        %v349 = vld [vmem:[%s345 + $0x18] sm:$0xff]
        %v350 = vmul.f32 %v200, %v346
        %v351 = vmul.f32 %v201, %v347
        %v352 = vmul.f32 %v202, %v348
        %v353 = vmul.f32 %v203, %v349
        %v354 = vadd.f32 %v350, %v351
        %v355 = vadd.f32 %v354, %v352
        %v356 = vadd.f32 %v355, %v353
        %v357 = vrot.slane %v356, 4
        %v358 = vadd.f32 %v356, %v357
        %v359 = vrot.slane %v358, 2
        %v360 = vadd.f32 %v358, %v359
        %v361 = vrot.slane %v360, 1
        %v362 = vadd.f32 %v360, %v361
        %v363 = vmul.f32 %v362, 0.17677669
        %v364 = vmax.f32 %v323, %v363
        %v365 = vsub.f32 %v323, %v364
        %v366 = vmul.f32 %v365, 1.442695
        %v367 = vpow.pop %v366
        %v368 = vsub.f32 %v363, %v364
        %v369 = vmul.f32 %v368, 1.442695
        %v370 = vpow.pop %v369
        %v371 = vmul.f32 %v367, %v331
        %v372 = vadd.f32 %v371, %v370
        %v373 = vmul.f32 %v367, %v340
        %v374 = vmul.f32 %v367, %v341
        %v375 = vmul.f32 %v367, %v342
        %v376 = vmul.f32 %v367, %v343
        %v377 = vmul.f32 %v370, %v346
        %v378 = vmul.f32 %v370, %v347
        %v379 = vmul.f32 %v370, %v348
        %v380 = vmul.f32 %v370, %v349
        %v381 = vadd.f32 %v373, %v377
        %v382 = vadd.f32 %v374, %v378
        %v383 = vadd.f32 %v375, %v379
        %v384 = vadd.f32 %v376, %v380
        %s385 = sadd.s32 0, 160
        %s386 = scalar_lea.vmem %s174, %s385 [#allocation5]
        %v387 = vld [vmem:[%s386] sm:$0xff]
        %v388 = vld [vmem:[%s386 + $0x8] sm:$0xff]
        %v389 = vld [vmem:[%s386 + $0x10] sm:$0xff]
        %v390 = vld [vmem:[%s386 + $0x18] sm:$0xff]
        %v391 = vmul.f32 %v200, %v387
        %v392 = vmul.f32 %v201, %v388
        %v393 = vmul.f32 %v202, %v389
        %v394 = vmul.f32 %v203, %v390
        %v395 = vadd.f32 %v391, %v392
        %v396 = vadd.f32 %v395, %v393
        %v397 = vadd.f32 %v396, %v394
        %v398 = vrot.slane %v397, 4
        %v399 = vadd.f32 %v397, %v398
        %v400 = vrot.slane %v399, 2
        %v401 = vadd.f32 %v399, %v400
        %v402 = vrot.slane %v401, 1
        %v403 = vadd.f32 %v401, %v402
        %v404 = vmul.f32 %v403, 0.17677669
        %v405 = vmax.f32 %v364, %v404
        %v406 = vsub.f32 %v364, %v405
        %v407 = vmul.f32 %v406, 1.442695
        %v408 = vpow.pop %v407
        %v409 = vsub.f32 %v404, %v405
        %v410 = vmul.f32 %v409, 1.442695
        %v411 = vpow.pop %v410
        %v412 = vmul.f32 %v408, %v372
        %v413 = vadd.f32 %v412, %v411
        %v414 = vmul.f32 %v408, %v381
        %v415 = vmul.f32 %v408, %v382
        %v416 = vmul.f32 %v408, %v383
        %v417 = vmul.f32 %v408, %v384
        %v418 = vmul.f32 %v411, %v387
        %v419 = vmul.f32 %v411, %v388
        %v420 = vmul.f32 %v411, %v389
        %v421 = vmul.f32 %v411, %v390
        %v422 = vadd.f32 %v414, %v418
        %v423 = vadd.f32 %v415, %v419
        %v424 = vadd.f32 %v416, %v420
        %v425 = vadd.f32 %v417, %v421
        %s426 = sadd.s32 0, 192
        %s427 = scalar_lea.vmem %s174, %s426 [#allocation5]
        %v428 = vld [vmem:[%s427] sm:$0xff]
        %v429 = vld [vmem:[%s427 + $0x8] sm:$0xff]
        %v430 = vld [vmem:[%s427 + $0x10] sm:$0xff]
        %v431 = vld [vmem:[%s427 + $0x18] sm:$0xff]
        %v432 = vmul.f32 %v200, %v428
        %v433 = vmul.f32 %v201, %v429
        %v434 = vmul.f32 %v202, %v430
        %v435 = vmul.f32 %v203, %v431
        %v436 = vadd.f32 %v432, %v433
        %v437 = vadd.f32 %v436, %v434
        %v438 = vadd.f32 %v437, %v435
        %v439 = vrot.slane %v438, 4
        %v440 = vadd.f32 %v438, %v439
        %v441 = vrot.slane %v440, 2
        %v442 = vadd.f32 %v440, %v441
        %v443 = vrot.slane %v442, 1
        %v444 = vadd.f32 %v442, %v443
        %v445 = vmul.f32 %v444, 0.17677669
        %v446 = vmax.f32 %v405, %v445
        %v447 = vsub.f32 %v405, %v446
        %v448 = vmul.f32 %v447, 1.442695
        %v449 = vpow.pop %v448
        %v450 = vsub.f32 %v445, %v446
        %v451 = vmul.f32 %v450, 1.442695
        %v452 = vpow.pop %v451
        %v453 = vmul.f32 %v449, %v413
        %v454 = vadd.f32 %v453, %v452
        %v455 = vmul.f32 %v449, %v422
        %v456 = vmul.f32 %v449, %v423
        %v457 = vmul.f32 %v449, %v424
        %v458 = vmul.f32 %v449, %v425
        %v459 = vmul.f32 %v452, %v428
        %v460 = vmul.f32 %v452, %v429
        %v461 = vmul.f32 %v452, %v430
        %v462 = vmul.f32 %v452, %v431
        %v463 = vadd.f32 %v455, %v459
        %v464 = vadd.f32 %v456, %v460
        %v465 = vadd.f32 %v457, %v461
        %v466 = vadd.f32 %v458, %v462
        %s467 = sadd.s32 0, 224
        %s468 = scalar_lea.vmem %s174, %s467 [#allocation5]
        %v469 = vld [vmem:[%s468] sm:$0xff]
        %v470 = vld [vmem:[%s468 + $0x8] sm:$0xff]
        %v471 = vld [vmem:[%s468 + $0x10] sm:$0xff]
        %v472 = vld [vmem:[%s468 + $0x18] sm:$0xff]
        %v473 = vmul.f32 %v200, %v469
        %v474 = vmul.f32 %v201, %v470
        %v475 = vmul.f32 %v202, %v471
        %v476 = vmul.f32 %v203, %v472
        %v477 = vadd.f32 %v473, %v474
        %v478 = vadd.f32 %v477, %v475
        %v479 = vadd.f32 %v478, %v476
        %v480 = vrot.slane %v479, 4
        %v481 = vadd.f32 %v479, %v480
        %v482 = vrot.slane %v481, 2
        %v483 = vadd.f32 %v481, %v482
        %v484 = vrot.slane %v483, 1
        %v485 = vadd.f32 %v483, %v484
        %v486 = vmul.f32 %v485, 0.17677669
        %v487 = vmax.f32 %v446, %v486
        %v488 = vsub.f32 %v446, %v487
        %v489 = vmul.f32 %v488, 1.442695
        %v490 = vpow.pop %v489
        %v491 = vsub.f32 %v486, %v487
        %v492 = vmul.f32 %v491, 1.442695
        %v493 = vpow.pop %v492
        %v494 = vmul.f32 %v490, %v454
        %v495 = vadd.f32 %v494, %v493
        %v496 = vmul.f32 %v490, %v463
        %v497 = vmul.f32 %v490, %v464
        %v498 = vmul.f32 %v490, %v465
        %v499 = vmul.f32 %v490, %v466
        %v500 = vmul.f32 %v493, %v469
        %v501 = vmul.f32 %v493, %v470
        %v502 = vmul.f32 %v493, %v471
        %v503 = vmul.f32 %v493, %v472
        %v504 = vadd.f32 %v496, %v500
        %v505 = vadd.f32 %v497, %v501
        %v506 = vadd.f32 %v498, %v502
        %v507 = vadd.f32 %v499, %v503
        %v508 = vrcp.pop %v495
        %v509 = vmul.f32 %v504, %v508
        %v510 = vmul.f32 %v505, %v508
        %v511 = vmul.f32 %v506, %v508
        %v512 = vmul.f32 %v507, %v508
        %513 = vst [vmem:[%s199] sm:$0xff] %v509
        %514 = vst [vmem:[%s199 + $0x8] sm:$0xff] %v510
        %515 = vst [vmem:[%s199 + $0x10] sm:$0xff] %v511
        %516 = vst [vmem:[%s199 + $0x18] sm:$0xff] %v512
        %s517 = sand.u32 %s82, 1
        %s518 = scalar_lea.sflag [#allocation4], %s517
        %s519 = sand.u32 %s82, 1
        %s520 = smul.addr %s519, 32
        %s521 = scalar_lea.vmem [#allocation7], %s520
        // Predicated region
        $region37: #{tpu_custom_call.1} parent=27 // pred_check
          %p522 = pneg %p92
        $region38: #{tpu_custom_call.1} parent=27 // pred_check_branch
          %524 = sbr.rel (%p522) target = $region40
        $region39: #{tpu_custom_call.1} parent=27 // pred_region
          %s526 = ssub.s32 512, 512
          %527 = vsyncadd %s518, %s526
          %s528 = smul.addr %s22, 128
          %s529 = scalar_lea.hbm %s2, %s528
          %s530 = sshll.u32 %s521, 4
          %s531 = int_to_ptr.vmem [resolvable:$true] %s530
          %536 = dma.vmem_to_hbm [thread:$0]  %s531, 512, %s529, %s518, 128, 256, 8
        $region40: #{tpu_custom_call.1} parent=27 // pred_fallthru
          _
      $region28: #{tpu_custom_call.1} parent=5 // pred_fallthru
        _
      %p537 = scmp.le.s32.totalorder 2, %s17
      // Predicated region
      $region41: #{tpu_custom_call.1} parent=5 // pred_check
        %p538 = pneg %p537
      $region42: #{tpu_custom_call.1} parent=5 // pred_check_branch
        %540 = sbr.rel (%p538) target = $region44
      $region43: #{tpu_custom_call.1} parent=5 // pred_region
        %s541 = ssub.s32 %s17, 2
        // Predicated region
        $region45: #{tpu_custom_call.1} parent=43 // pred_check
          %p542 = pneg %p98
        $region46: #{tpu_custom_call.1} parent=43 // pred_check_branch
          %544 = sbr.rel (%p542) target = $region48
        $region47: #{tpu_custom_call.1} parent=43 // pred_region
          %s545 = sand.u32 %s83, 1
          %s546 = scalar_lea.sflag [#allocation4], %s545
          %s547 = sand.u32 %s83, 1
          %s548 = smul.addr %s547, 32
          %s549 = scalar_lea.vmem [#allocation7], %s548
          %550 = dma.done %s546, 512
        $region48: #{tpu_custom_call.1} parent=43 // pred_fallthru
          _
      $region44: #{tpu_custom_call.1} parent=5 // pred_fallthru
        _
    $region6: #{tpu_custom_call.1} parent=1 // loop_footer
      %s21 = sadd.s32 1, %s17
    $region7: #{tpu_custom_call.1} parent=1 // loop_footer_branch
      %16 = sbr.rel target = $region3
    $region8: #{tpu_custom_call.1} parent=1 // loop_exit
      _
    %551 = vsyncpa [#allocation3], 1
    %s552 = scalar_lea.sflag [#allocation3], 1
    %553 = vsyncpa %s552, 1
    %554 = vsyncpa [#allocation6], 1
    %s555 = scalar_lea.sflag [#allocation6], 1
    %556 = vsyncpa %s555, 1
    %557 = vsyncpa [#allocation4], 1
    %s558 = scalar_lea.sflag [#allocation4], 1
    %559 = vsyncpa %s558, 1

</llo_original>
